<compile_context>
chip_gen: v6e
topology: v6e:2x2x1
jax: 0.10.0
libtpu: 0.0.40
codegen_flags: <defaults>
</compile_context>

<pallas_src>
import jax
import jax.numpy as jnp
from jax.experimental import pallas as pl
from jax.experimental.pallas import tpu as pltpu


def _copy_kernel(x_ref, o_ref):
    # Pure pass-through of the current tile.
    o_ref[...] = x_ref[...]


_LANE_CANDIDATES = (8192, 4096, 2048, 1024, 512, 256, 128)
_TILE_TARGET_BYTES = 2 * 1024 * 1024   # ~2 MiB/tile -> ~8 MiB pipelined (in+out, x2 bufs)
_VMEM_LIMIT_BYTES = 32 * 1024 * 1024   # > v5e's 16 MiB default, < v7x's 64 MiB physical


def _round_up(x: int, m: int) -> int:
    return -(-x // m) * m


def debug_store_recent_copy(x: jax.Array) -> jax.Array:
    """Identity copy of x implemented with a lane-dense tiled Pallas TPU kernel."""
    orig_shape = x.shape
    dtype = x.dtype
    total = x.size
    itemsize = jnp.dtype(dtype).itemsize

    # Empty / tiny inputs: the module is an identity; don't pad a handful of
    # bytes up to a full (8,128) tile just to copy them.
    if total < 128:
        return x

    # ---- lane-dense 2-D view ------------------------------------------------
    # Widest lane extent (multiple of 128) dividing the flat size -> unmasked,
    # full-width stores.  Fall back to a padded tail if nothing divides.
    lane = None
    for cand in _LANE_CANDIDATES:
        if total % cand == 0:
            lane = cand
            break
    if lane is None:
        lane = 512
    padded_total = _round_up(total, lane)
    pad = padded_total - total

    flat = x.reshape(-1)
    if pad:
        flat = jnp.pad(flat, (0, pad))
    rows = padded_total // lane
    x2 = flat.reshape(rows, lane)

    # ---- tile rows by VMEM byte budget ---------------------------------------
    # Sub-32-bit dtypes pack rows along sublanes: keep tiles a multiple of the
    # packed sublane group (8 for f32, 16 for bf16, 32 for int8/fp8).
    sub = max(8, 32 // max(1, itemsize))
    bytes_per_row = lane * itemsize

    if rows <= sub:
        tile_rows = rows  # single full-extent block (always legal)
    else:
        budget_rows = max(sub, (_TILE_TARGET_BYTES // bytes_per_row) // sub * sub)
        if rows * bytes_per_row >= 2 * _TILE_TARGET_BYTES:
            # Large array: also aim for >= ~8 grid steps so both v7x
            # TensorCores get work and the DMA pipeline can overlap.
            rows_for_8_steps = max(sub, _round_up(pl.cdiv(rows, 8), sub))
            tile_rows = min(budget_rows, rows_for_8_steps)
        else:
            tile_rows = min(budget_rows, rows)

    grid = (pl.cdiv(rows, tile_rows),)

    out2 = pl.pallas_call(
        _copy_kernel,
        out_shape=jax.ShapeDtypeStruct((rows, lane), dtype),
        grid_spec=pl.GridSpec(
            grid=grid,
            in_specs=[pl.BlockSpec((tile_rows, lane), lambda i: (i, 0))],
            out_specs=pl.BlockSpec((tile_rows, lane), lambda i: (i, 0)),
        ),
        compiler_params=pltpu.CompilerParams(
            dimension_semantics=("parallel",),
            vmem_limit_bytes=_VMEM_LIMIT_BYTES,
        ),
        cost_estimate=pl.CostEstimate(
            flops=0,
            transcendentals=0,
            bytes_accessed=2 * padded_total * itemsize,
        ),
    )(x2)

    out_flat = out2.reshape(-1)
    if pad:
        out_flat = out_flat[:total]
    return out_flat.reshape(orig_shape)


class DebugStoreRecent:
    """JAX/Pallas port of the PyTorch DebugStoreRecent module.

    No parameters.  __call__(x) stores the most recent input (host-side
    attribute, matching the PyTorch side effect) and returns it; the returned
    value is produced by the Pallas identity-copy kernel.
    """

    def __init__(self):
        self.stored = None

    def __call__(self, x: jax.Array) -> jax.Array:
        y = debug_store_recent_copy(x)
        self.stored = x  # side effect: keep the most recent input
        return y


if __name__ == "__main__":
    key = jax.random.PRNGKey(0)

    # NCHW input, small shapes: batch=2, channels=4, spatial=16x16
    x = jax.random.normal(key, (2, 4, 16, 16), dtype=jnp.float32)

    mod = DebugStoreRecent()
    y = mod(x)
    jax.block_until_ready(y)

    assert y.shape == x.shape and y.dtype == x.dtype
    assert jnp.array_equal(y, x)
    assert mod.stored is x  # stored the most recent input

    # Exercise the padded-tail path (flat size not a multiple of 128).
    x2 = jax.random.normal(jax.random.PRNGKey(1), (8, 8, 33), dtype=jnp.float32)
    y2 = mod(x2)
    jax.block_until_ready(y2)
    assert y2.shape == x2.shape and jnp.array_equal(y2, x2)
    assert mod.stored is x2

    print("KERNEL_OK")
</pallas_src>

<mosaic_0001>
module attributes {stable_mosaic.version = 11 : i64} {
  func.func @_copy_kernel(%arg0: i32, %arg1: memref<1x2048xf32, #tpu.memory_space<vmem>>, %arg2: memref<1x2048xf32, #tpu.memory_space<vmem>>) attributes {dimension_semantics = [#tpu.dimension_semantics<parallel>], iteration_bounds = array<i64: 1>, scalar_prefetch = 0 : i64, scratch_operands = 0 : i64, tpu.core_type = #tpu.core_type<tc>, window_params = [{transform_indices = @transform_0, window_bounds = array<i64: 1, 2048>}, {transform_indices = @transform_1, window_bounds = array<i64: 1, 2048>}]} {
    %c0 = arith.constant 0 : index
    %c0_0 = arith.constant 0 : index
    %0 = vector.load %arg1[%c0, %c0_0] : memref<1x2048xf32, #tpu.memory_space<vmem>>, vector<1x2048xf32>
    %c0_1 = arith.constant 0 : index
    %c0_2 = arith.constant 0 : index
    %1 = vector.load %arg2[%c0_1, %c0_2] : memref<1x2048xf32, #tpu.memory_space<vmem>>, vector<1x2048xf32>
    tpu.vector_store %arg2[%c0_1, %c0_2], %0 {strides = array<i32>} : memref<1x2048xf32, #tpu.memory_space<vmem>>, vector<1x2048xf32>,
    return
  }
  func.func @transform_0(%arg0: i32) -> (i32, i32) {
    %c0_i32 = arith.constant 0 : i32
    %c0_i32_0 = arith.constant 0 : i32
    return %arg0, %c0_i32 : i32, i32
  }
  func.func @transform_1(%arg0: i32) -> (i32, i32) {
    %c0_i32 = arith.constant 0 : i32
    %c0_i32_0 = arith.constant 0 : i32
    return %arg0, %c0_i32 : i32, i32
  }
}

</mosaic_0001>

<llo_original>
// kernel: tpu_custom_call.1
$region0: #{tpu_custom_call.1}
  #allocation0 [shape = 'u32[]', space=smem, size = 0x4, offset = 0x4, fixed_abs, tag = 'smem constant byte address 0x4 - core index']
  #allocation1 [shape = 'u32[144,128]{1,0:T(1,128)}', space=vmem, size = 0x12000, scoped, tag = 'internal scratch']
  %s0 = inlined_call_operand.hbm [shape: f32[1,2048], index: 0, kind: input, shape index: {}]
  %s1 = inlined_call_operand.hbm [shape: f32[1,2048], index: 1, kind: output, shape index: {}]
  %s2 = sld [smem:[#allocation0]]
  $region18: #{tpu_custom_call.1} parent=0
    _
  %s4 = ssub.s32 1, %s2
  %s5 = scalar_select 0, %s4, %s2
  $region1: #{tpu_custom_call.1} parent=0
    #allocation2 [shape = 'u8[8192]{0}', space=vmem, size = 0x2000, scoped, tag = 'input window, operand 0, single buffered']
    #allocation3 [shape = 's32[1]{0}', space=sflag, size = 0x4, scoped, tag = 'scoped memory for tpu_custom_call.1']
    #allocation4 [shape = 's32[1]{0}', space=sflag, size = 0x4, scoped, tag = 'scoped memory for tpu_custom_call.1']
    #allocation5 [shape = 'u8[8192]{0}', space=vmem, size = 0x2000, scoped, tag = 'output window, operand 0, single buffered']
    %6 = vsyncpa [#allocation3], 0
    %7 = vsyncpa [#allocation4], 0
    // Predicated region
    $region2: #{tpu_custom_call.1} parent=1 // pred_check
      _
    $region3: #{tpu_custom_call.1} parent=1 // pred_check_branch
      %9 = sbr.rel (0) target = $region5
    $region4: #{tpu_custom_call.1} parent=1 // pred_region
      %s11 = ssub.s32 256, 256
      %12 = vsyncadd [#allocation3], %s11
      %s14 = sshll.u32 [#allocation2], 4
      %s15 = int_to_ptr.vmem [resolvable:$true] %s14
      %17 = dma.hbm_to_vmem [thread:$0]  %s0, 256, %s15, [#allocation3]
    $region5: #{tpu_custom_call.1} parent=1 // pred_fallthru
      _
    // Predicated region
    $region6: #{tpu_custom_call.1} parent=1 // pred_check
      _
    $region7: #{tpu_custom_call.1} parent=1 // pred_check_branch
      %19 = sbr.rel (0) target = $region9
    $region8: #{tpu_custom_call.1} parent=1 // pred_region
      %20 = dma.done [#allocation3], 256
    $region9: #{tpu_custom_call.1} parent=1 // pred_fallthru
      _
    %v21 = vld [vmem:[#allocation2] sm:$0xff]
    %v22 = vld [vmem:[#allocation2 + $0x8] sm:$0xff]
    %23 = vst [vmem:[#allocation5] sm:$0xff] %v21
    %24 = vst [vmem:[#allocation5 + $0x8] sm:$0xff] %v22
    // Predicated region
    $region10: #{tpu_custom_call.1} parent=1 // pred_check
      _
    $region11: #{tpu_custom_call.1} parent=1 // pred_check_branch
      %26 = sbr.rel (0) target = $region13
    $region12: #{tpu_custom_call.1} parent=1 // pred_region
      %s28 = ssub.s32 256, 256
      %29 = vsyncadd [#allocation4], %s28
      %s31 = sshll.u32 [#allocation5], 4
      %s32 = int_to_ptr.vmem [resolvable:$true] %s31
      %34 = dma.vmem_to_hbm [thread:$0]  %s32, 256, %s1, [#allocation4]
    $region13: #{tpu_custom_call.1} parent=1 // pred_fallthru
      _
    // Predicated region
    $region14: #{tpu_custom_call.1} parent=1 // pred_check
      _
    $region15: #{tpu_custom_call.1} parent=1 // pred_check_branch
      %36 = sbr.rel (0) target = $region17
    $region16: #{tpu_custom_call.1} parent=1 // pred_region
      %37 = dma.done [#allocation4], 256
    $region17: #{tpu_custom_call.1} parent=1 // pred_fallthru
      _
    %38 = vsyncpa [#allocation3], 1
    %39 = vsyncpa [#allocation4], 1

</llo_original>
